<compile_context>
chip_gen: v5e
topology: v5e:2x2
jax: 0.10.0
libtpu: 0.0.40
codegen_flags: <defaults>
</compile_context>

<pallas_src>
import functools

import jax
import jax.numpy as jnp
from jax.experimental import pallas as pl
from jax.experimental.pallas import tpu as pltpu

_EPS = 1e-5
_LANE = 128
_SUBLANE = 8
_VMEM_BUDGET = 40 << 20     # working-set budget used to pick tile_m


# ----------------------------------------------------------------------------
# small helpers
# ----------------------------------------------------------------------------
def _round_up(x, m):
    return (x + m - 1) // m * m


def _pad2d(a, rows, cols):
    return jnp.pad(a, ((0, rows - a.shape[0]), (0, cols - a.shape[1])))


def _vmem_limit(block_bytes):
    # double-buffered blocks + margin, clamped well under v7x's 64 MiB VMEM.
    need = 2 * block_bytes + (2 << 20)
    return int(min(max(need, 16 << 20), 48 << 20))


def _pick_tile_m(m, k_pad, c_pad):
    """Largest M-tile (multiple of 8) whose double-buffered blocks fit VMEM."""
    m_aligned = _round_up(m, _SUBLANE)
    tile = _SUBLANE
    for cand in (512, 256, 128, 64, 32, 16, 8):
        # 2 buffers x 4 bytes x (patches + weight + bias + out + stats)
        need = 8 * (cand * k_pad + k_pad * c_pad + c_pad
                    + cand * c_pad + 2 * c_pad)
        if need <= _VMEM_BUDGET:
            tile = cand
            break
    return min(tile, m_aligned)


# ----------------------------------------------------------------------------
# Pallas kernels
# ----------------------------------------------------------------------------
def _matmul_bias_stats_kernel(p_ref, w_ref, b_ref, out_ref, stats_ref, *,
                              m_true, tile_m, needs_mask):
    """out = patches @ W + b ; stats = per-tile [sum, sum_sq] over valid rows."""
    acc = jnp.dot(p_ref[...], w_ref[...], preferred_element_type=jnp.float32)
    acc = acc + b_ref[...]
    out_ref[...] = acc
    if needs_mask:
        # Mask padded M rows out of the BatchNorm statistics (only present
        # when M is not a multiple of tile_m).
        row = (jax.lax.broadcasted_iota(jnp.int32, acc.shape, 0)
               + pl.program_id(0) * tile_m)
        am = jnp.where(row < m_true, acc, 0.0)
    else:
        am = acc
    s = jnp.sum(am, axis=0, keepdims=True)            # (1, C)  masked sum
    sq = jnp.sum(am * acc, axis=0, keepdims=True)      # (1, C)  masked sum sq
    stats_ref[...] = jnp.concatenate([s, sq], axis=0)[None]      # (1, 2, C)


def _scale_shift(prm, r0, m_true):
    """Turn rows [sum, sum_sq, gamma, beta] into BN scale/shift (train mode)."""
    inv_m = jnp.float32(1.0 / m_true)
    mean = prm[r0:r0 + 1, :] * inv_m
    var = jnp.maximum(prm[r0 + 1:r0 + 2, :] * inv_m - mean * mean, 0.0)
    scale = prm[r0 + 2:r0 + 3, :] * jax.lax.rsqrt(var + _EPS)
    shift = prm[r0 + 3:r0 + 4, :] - mean * scale
    return scale, shift


def _bn_act_kernel(conv_ref, prm_ref, out_ref, *, m_true, relu):
    """out = [relu]( BN_train(conv) )."""
    scale, shift = _scale_shift(prm_ref[...], 0, m_true)
    y = conv_ref[...] * scale + shift
    if relu:
        y = jnp.maximum(y, 0.0)
    out_ref[...] = y


def _bn_relu_add_relu_kernel(conv_ref, res_ref, prm_ref, out_ref, *, m_true):
    """out = relu( residual + relu( BN_train(conv) ) )   (identity shortcut)."""
    scale, shift = _scale_shift(prm_ref[...], 0, m_true)
    y = jnp.maximum(conv_ref[...] * scale + shift, 0.0)
    out_ref[...] = jnp.maximum(res_ref[...] + y, 0.0)


def _bn_relu_add_bn_relu_kernel(conv_ref, resconv_ref, prm_ref, out_ref, *,
                                m_true):
    """out = relu( BN_d(res_conv) + relu( BN_2(conv) ) )  (downsample shortcut)."""
    s2, t2 = _scale_shift(prm_ref[...], 0, m_true)
    sd, td = _scale_shift(prm_ref[...], 4, m_true)
    y = jnp.maximum(conv_ref[...] * s2 + t2, 0.0)
    out_ref[...] = jnp.maximum(resconv_ref[...] * sd + td + y, 0.0)


# ----------------------------------------------------------------------------
# pallas_call wrappers
# ----------------------------------------------------------------------------
def conv_matmul_stats(patches, w, b, m_true, *, tile_m):
    """Tiled (tile_m,K)@(K,C)+b over an M grid; returns conv (M_pad,C) and
    summed per-channel [sum, sum_sq] stats over the first m_true rows."""
    m_pad, k_pad = patches.shape
    c_pad = w.shape[1]
    n_tiles = m_pad // tile_m
    kernel = functools.partial(_matmul_bias_stats_kernel,
                               m_true=m_true, tile_m=tile_m,
                               needs_mask=(m_pad != m_true))
    block_bytes = 4 * (tile_m * k_pad + k_pad * c_pad + c_pad
                       + tile_m * c_pad + 2 * c_pad)
    conv_out, stats = pl.pallas_call(
        kernel,
        out_shape=(jax.ShapeDtypeStruct((m_pad, c_pad), jnp.float32),
                   jax.ShapeDtypeStruct((n_tiles, 2, c_pad), jnp.float32)),
        grid=(n_tiles,),
        in_specs=[pl.BlockSpec((tile_m, k_pad), lambda i: (i, 0)),
                  pl.BlockSpec((k_pad, c_pad), lambda i: (0, 0)),
                  pl.BlockSpec((1, c_pad), lambda i: (0, 0))],
        out_specs=(pl.BlockSpec((tile_m, c_pad), lambda i: (i, 0)),
                   pl.BlockSpec((1, 2, c_pad), lambda i: (i, 0, 0))),
        compiler_params=pltpu.CompilerParams(
            dimension_semantics=("parallel",),
            vmem_limit_bytes=_vmem_limit(block_bytes)),
        cost_estimate=pl.CostEstimate(
            flops=2 * m_pad * k_pad * c_pad,
            transcendentals=0,
            bytes_accessed=4 * (m_pad * k_pad + k_pad * c_pad
                                + m_pad * c_pad)),
    )(patches, w, b)
    return conv_out, jnp.sum(stats, axis=0)           # (2, c_pad) tiny reduce


def bn_apply(conv_out, prm, m_true, *, tile_m, relu):
    """Apply BN(+ReLU) to a conv result using packed prm = [sum,sumsq,g,b]."""
    m_pad, c_pad = conv_out.shape
    n_tiles = m_pad // tile_m
    kernel = functools.partial(_bn_act_kernel, m_true=m_true, relu=relu)
    block_bytes = 4 * (2 * tile_m * c_pad + prm.shape[0] * c_pad)
    return pl.pallas_call(
        kernel,
        out_shape=jax.ShapeDtypeStruct((m_pad, c_pad), jnp.float32),
        grid=(n_tiles,),
        in_specs=[pl.BlockSpec((tile_m, c_pad), lambda i: (i, 0)),
                  pl.BlockSpec(prm.shape, lambda i: (0, 0))],
        out_specs=pl.BlockSpec((tile_m, c_pad), lambda i: (i, 0)),
        compiler_params=pltpu.CompilerParams(
            dimension_semantics=("parallel",),
            vmem_limit_bytes=_vmem_limit(block_bytes)),
        cost_estimate=pl.CostEstimate(
            flops=4 * m_pad * c_pad, transcendentals=c_pad,
            bytes_accessed=4 * 2 * m_pad * c_pad),
    )(conv_out, prm)


def bn_residual_apply(conv_out, res, prm, m_true, *, tile_m, res_has_bn):
    """Fused epilogue: BN2 + ReLU + residual add (+shortcut BN) + final ReLU."""
    m_pad, c_pad = conv_out.shape
    n_tiles = m_pad // tile_m
    body = (_bn_relu_add_bn_relu_kernel if res_has_bn
            else _bn_relu_add_relu_kernel)
    kernel = functools.partial(body, m_true=m_true)
    block_bytes = 4 * (3 * tile_m * c_pad + prm.shape[0] * c_pad)
    return pl.pallas_call(
        kernel,
        out_shape=jax.ShapeDtypeStruct((m_pad, c_pad), jnp.float32),
        grid=(n_tiles,),
        in_specs=[pl.BlockSpec((tile_m, c_pad), lambda i: (i, 0)),
                  pl.BlockSpec((tile_m, c_pad), lambda i: (i, 0)),
                  pl.BlockSpec(prm.shape, lambda i: (0, 0))],
        out_specs=pl.BlockSpec((tile_m, c_pad), lambda i: (i, 0)),
        compiler_params=pltpu.CompilerParams(
            dimension_semantics=("parallel",),
            vmem_limit_bytes=_vmem_limit(block_bytes)),
        cost_estimate=pl.CostEstimate(
            flops=8 * m_pad * c_pad, transcendentals=2 * c_pad,
            bytes_accessed=4 * 3 * m_pad * c_pad),
    )(conv_out, res, prm)


# ----------------------------------------------------------------------------
# Glue: im2col + weight layout + module container
# ----------------------------------------------------------------------------
def im2col(x_nhwc, k, stride, pad):
    """Return (N*Ho*Wo, k*k*C) patches, column order = (kh, kw, c)."""
    N, H, W, C = x_nhwc.shape
    xp = jnp.pad(x_nhwc, ((0, 0), (pad, pad), (pad, pad), (0, 0)))
    Ho = (H + 2 * pad - k) // stride + 1
    Wo = (W + 2 * pad - k) // stride + 1
    cols = []
    for di in range(k):
        for dj in range(k):
            cols.append(xp[:, di:di + stride * (Ho - 1) + 1:stride,
                           dj:dj + stride * (Wo - 1) + 1:stride, :])
    patches = jnp.concatenate(cols, axis=-1)           # (N, Ho, Wo, k*k*C)
    return patches.reshape(N * Ho * Wo, k * k * C), (N, Ho, Wo)


def _oihw_to_matmul(w_oihw):
    # (Cout, Cin, kh, kw) -> (kh*kw*Cin, Cout), matching im2col column order.
    cout = w_oihw.shape[0]
    return jnp.transpose(w_oihw, (2, 3, 1, 0)).reshape(-1, cout)


class ResidualBlockPallas:
    """Pallas implementation of the PyTorch ResidualBlock module."""

    def __init__(self, key, in_channels, out_channels, stride=1,
                 is_downsample=False):
        self.in_channels = in_channels
        self.out_channels = out_channels
        self.stride = stride
        self.is_downsample = is_downsample

        ks = jax.random.split(key, 12)

        def init(k, shape, scale=0.1):
            return (scale * jax.random.normal(k, shape)).astype(jnp.float32)

        # conv_x[0]: Conv2d(in, out, 3, stride, padding=1)
        self.w1 = init(ks[0], (out_channels, in_channels, 3, 3))
        self.b1 = init(ks[1], (out_channels,))
        # conv_x[1]: BatchNorm2d(out)
        self.g1 = 1.0 + init(ks[2], (out_channels,))
        self.be1 = init(ks[3], (out_channels,))
        # conv_x[3]: Conv2d(out, out, 3, 1, padding=1)
        self.w2 = init(ks[4], (out_channels, out_channels, 3, 3))
        self.b2 = init(ks[5], (out_channels,))
        # conv_x[4]: BatchNorm2d(out)
        self.g2 = 1.0 + init(ks[6], (out_channels,))
        self.be2 = init(ks[7], (out_channels,))
        if is_downsample:
            # down_sample: Conv2d(in, out, 1, stride=2) + BatchNorm2d(out)
            self.wd = init(ks[8], (out_channels, in_channels, 1, 1))
            self.bd = init(ks[9], (out_channels,))
            self.gd = 1.0 + init(ks[10], (out_channels,))
            self.bed = init(ks[11], (out_channels,))

    def __call__(self, x_nchw):
        cin, cout = self.in_channels, self.out_channels
        x = jnp.transpose(x_nchw, (0, 2, 3, 1)).astype(jnp.float32)   # NHWC
        c_pad = _round_up(cout, _LANE)

        def row(v):                                    # (1, c_pad) padded row
            return _pad2d(v.reshape(1, -1), 1, c_pad)

        # ---- conv1 (3x3, stride, pad 1) -> BN -> ReLU ----------------------
        p1, (N, Ho, Wo) = im2col(x, 3, self.stride, 1)
        M = N * Ho * Wo
        k1_pad = _round_up(p1.shape[1], _LANE)
        k2_pad = _round_up(9 * cout, _LANE)
        # One tile size for all passes of the block (worst-case K governs).
        tile_m = _pick_tile_m(M, max(k1_pad, k2_pad), c_pad)
        m_pad = _round_up(M, tile_m)

        conv1, stats1 = conv_matmul_stats(
            _pad2d(p1, m_pad, k1_pad),
            _pad2d(_oihw_to_matmul(self.w1), k1_pad, c_pad),
            row(self.b1), M, tile_m=tile_m)
        prm1 = jnp.concatenate([stats1, row(self.g1), row(self.be1)], axis=0)
        h = bn_apply(conv1, prm1, M, tile_m=tile_m, relu=True)

        # ---- conv2 (3x3, stride 1, pad 1) ----------------------------------
        h_img = h[:M, :cout].reshape(N, Ho, Wo, cout)
        p2, _ = im2col(h_img, 3, 1, 1)
        conv2, stats2 = conv_matmul_stats(
            _pad2d(p2, m_pad, k2_pad),
            _pad2d(_oihw_to_matmul(self.w2), k2_pad, c_pad),
            row(self.b2), M, tile_m=tile_m)
        prm2 = jnp.concatenate([stats2, row(self.g2), row(self.be2)], axis=0)

        # ---- shortcut + fused BN/ReLU/add/ReLU epilogue --------------------
        if self.is_downsample:
            # 1x1 conv with stride 2 (hard-coded, mirroring the PyTorch spec).
            xs = x[:, ::2, ::2, :].reshape(-1, cin)
            kd_pad = _round_up(cin, _LANE)
            convd, statsd = conv_matmul_stats(
                _pad2d(xs, m_pad, kd_pad),
                _pad2d(_oihw_to_matmul(self.wd), kd_pad, c_pad),
                row(self.bd), M, tile_m=tile_m)
            prm = jnp.concatenate(
                [prm2, statsd, row(self.gd), row(self.bed)], axis=0)  # (8, C)
            out = bn_residual_apply(conv2, convd, prm, M,
                                    tile_m=tile_m, res_has_bn=True)
        else:
            # identity shortcut (requires cin == cout and stride == 1).
            res = _pad2d(x.reshape(-1, cin), m_pad, c_pad)
            out = bn_residual_apply(conv2, res, prm2, M,
                                    tile_m=tile_m, res_has_bn=False)

        out = out[:M, :cout].reshape(N, Ho, Wo, cout)
        return jnp.transpose(out, (0, 3, 1, 2))        # back to NCHW


# ----------------------------------------------------------------------------
# Pure-JAX reference (correctness check only; HIGHEST-precision convs)
# ----------------------------------------------------------------------------
def ref_forward(blk, x_nchw):
    hp = jax.lax.Precision.HIGHEST

    def conv(x, w, b, stride, pad):
        y = jax.lax.conv_general_dilated(
            x, w, (stride, stride), [(pad, pad), (pad, pad)],
            dimension_numbers=("NCHW", "OIHW", "NCHW"), precision=hp)
        return y + b[None, :, None, None]

    def bn(y, g, be):
        mean = jnp.mean(y, axis=(0, 2, 3), keepdims=True)
        var = jnp.mean((y - mean) ** 2, axis=(0, 2, 3), keepdims=True)
        return ((y - mean) * jax.lax.rsqrt(var + _EPS)
                * g[None, :, None, None] + be[None, :, None, None])

    h = jax.nn.relu(bn(conv(x_nchw, blk.w1, blk.b1, blk.stride, 1),
                       blk.g1, blk.be1))
    h = jax.nn.relu(bn(conv(h, blk.w2, blk.b2, 1, 1), blk.g2, blk.be2))
    if blk.is_downsample:
        res = bn(conv(x_nchw, blk.wd, blk.bd, 2, 0), blk.gd, blk.bed)
    else:
        res = x_nchw
    return jax.nn.relu(res + h)


# ----------------------------------------------------------------------------
if __name__ == "__main__":
    key = jax.random.PRNGKey(0)
    k_x, k_b1, k_b2 = jax.random.split(key, 3)

    x = jax.random.normal(k_x, (2, 4, 16, 16), dtype=jnp.float32)

    # Kernel uses default MXU precision (not HIGHEST), reference uses HIGHEST
    # -> compare at a tolerance that absorbs bf16-pass matmul noise.
    TOL = 3e-2

    # Case 1: identity residual (stride=1, in_channels == out_channels)
    blk1 = ResidualBlockPallas(k_b1, in_channels=4, out_channels=4,
                               stride=1, is_downsample=False)
    out1 = jax.block_until_ready(blk1(x))
    ref1 = jax.block_until_ready(ref_forward(blk1, x))
    assert out1.shape == (2, 4, 16, 16)
    assert jnp.allclose(out1, ref1, rtol=TOL, atol=TOL), \
        float(jnp.max(jnp.abs(out1 - ref1)))

    # Case 2: downsample residual (stride=2, 1x1 stride-2 conv + BN shortcut)
    blk2 = ResidualBlockPallas(k_b2, in_channels=4, out_channels=8,
                               stride=2, is_downsample=True)
    out2 = jax.block_until_ready(blk2(x))
    ref2 = jax.block_until_ready(ref_forward(blk2, x))
    assert out2.shape == (2, 8, 8, 8)
    assert jnp.allclose(out2, ref2, rtol=TOL, atol=TOL), \
        float(jnp.max(jnp.abs(out2 - ref2)))

    print("KERNEL_OK")
</pallas_src>

<mosaic_0001>
module attributes {stable_mosaic.version = 11 : i64} {
  func.func @_matmul_bias_stats_kernel(%arg0: i32, %arg1: memref<512x128xf32, #tpu.memory_space<vmem>>, %arg2: memref<128x128xf32, #tpu.memory_space<vmem>>, %arg3: memref<1x128xf32, #tpu.memory_space<vmem>>, %arg4: memref<512x128xf32, #tpu.memory_space<vmem>>, %arg5: memref<1x2x128xf32, #tpu.memory_space<vmem>>) attributes {dimension_semantics = [#tpu.dimension_semantics<parallel>], iteration_bounds = array<i64: 1>, scalar_prefetch = 0 : i64, scratch_operands = 0 : i64, tpu.core_type = #tpu.core_type<tc>, window_params = [{transform_indices = @transform_0, window_bounds = array<i64: 512, 128>}, {pipeline_mode = #tpu.pipeline_mode<synchronous>, transform_indices = @transform_1, window_bounds = array<i64: 128, 128>}, {pipeline_mode = #tpu.pipeline_mode<synchronous>, transform_indices = @transform_2, window_bounds = array<i64: 1, 128>}, {transform_indices = @transform_3, window_bounds = array<i64: 512, 128>}, {transform_indices = @transform_4, window_bounds = array<i64: 1, 2, 128>}]} {
    %c0 = arith.constant 0 : index
    %c0_0 = arith.constant 0 : index
    %0 = vector.load %arg1[%c0, %c0_0] : memref<512x128xf32, #tpu.memory_space<vmem>>, vector<512x128xf32>
    %c0_1 = arith.constant 0 : index
    %c0_2 = arith.constant 0 : index
    %1 = vector.load %arg2[%c0_1, %c0_2] : memref<128x128xf32, #tpu.memory_space<vmem>>, vector<128x128xf32>
    %cst = arith.constant dense<0.000000e+00> : vector<512x128xf32>
    %2 = tpu.matmul %0, %1, %cst {dimension_numbers = #tpu.dot_dimension_numbers<[1], [0], [0], [1], [0, 0, 1, 1], [], []>} : vector<512x128xf32>, vector<128x128xf32>, vector<512x128xf32> -> vector<512x128xf32>
    %c0_3 = arith.constant 0 : index
    %c0_4 = arith.constant 0 : index
    %3 = vector.load %arg3[%c0_3, %c0_4] : memref<1x128xf32, #tpu.memory_space<vmem>>, vector<1x128xf32>
    %4 = vector.broadcast %3 : vector<1x128xf32> to vector<512x128xf32>
    %5 = arith.addf %2, %4 : vector<512x128xf32>
    %c0_5 = arith.constant 0 : index
    %c0_6 = arith.constant 0 : index
    %6 = vector.load %arg4[%c0_5, %c0_6] : memref<512x128xf32, #tpu.memory_space<vmem>>, vector<512x128xf32>
    tpu.vector_store %arg4[%c0_5, %c0_6], %5 {strides = array<i32>} : memref<512x128xf32, #tpu.memory_space<vmem>>, vector<512x128xf32>,
    %cst_7 = arith.constant dense<0.000000e+00> : vector<128xf32>
    %7 = vector.multi_reduction <add>, %5, %cst_7 [0] : vector<512x128xf32> to vector<128xf32>
    %8 = vector.shape_cast %7 : vector<128xf32> to vector<1x128xf32>
    %9 = arith.mulf %5, %5 : vector<512x128xf32>
    %cst_8 = arith.constant dense<0.000000e+00> : vector<128xf32>
    %10 = vector.multi_reduction <add>, %9, %cst_8 [0] : vector<512x128xf32> to vector<128xf32>
    %11 = vector.shape_cast %10 : vector<128xf32> to vector<1x128xf32>
    %12 = tpu.concatenate %8, %11 in 0 : vector<1x128xf32>, vector<1x128xf32> -> vector<2x128xf32>
    %13 = vector.shape_cast %12 : vector<2x128xf32> to vector<1x2x128xf32>
    %c0_9 = arith.constant 0 : index
    %c0_10 = arith.constant 0 : index
    %c0_11 = arith.constant 0 : index
    %14 = vector.load %arg5[%c0_9, %c0_10, %c0_11] : memref<1x2x128xf32, #tpu.memory_space<vmem>>, vector<1x2x128xf32>
    tpu.vector_store %arg5[%c0_9, %c0_10, %c0_11], %13 {strides = array<i32>} : memref<1x2x128xf32, #tpu.memory_space<vmem>>, vector<1x2x128xf32>,
    return
  }
  func.func @transform_0(%arg0: i32) -> (i32, i32) {
    %c0_i32 = arith.constant 0 : i32
    %c0_i32_0 = arith.constant 0 : i32
    return %arg0, %c0_i32 : i32, i32
  }
  func.func @transform_1(%arg0: i32) -> (i32, i32) {
    %c0_i32 = arith.constant 0 : i32
    %c0_i32_0 = arith.constant 0 : i32
    %c0_i32_1 = arith.constant 0 : i32
    return %c0_i32, %c0_i32_0 : i32, i32
  }
  func.func @transform_2(%arg0: i32) -> (i32, i32) {
    %c0_i32 = arith.constant 0 : i32
    %c0_i32_0 = arith.constant 0 : i32
    %c0_i32_1 = arith.constant 0 : i32
    return %c0_i32, %c0_i32_0 : i32, i32
  }
  func.func @transform_3(%arg0: i32) -> (i32, i32) {
    %c0_i32 = arith.constant 0 : i32
    %c0_i32_0 = arith.constant 0 : i32
    return %arg0, %c0_i32 : i32, i32
  }
  func.func @transform_4(%arg0: i32) -> (i32, i32, i32) {
    %c0_i32 = arith.constant 0 : i32
    %c0_i32_0 = arith.constant 0 : i32
    %c0_i32_1 = arith.constant 0 : i32
    return %arg0, %c0_i32, %c0_i32_0 : i32, i32, i32
  }
}

</mosaic_0001>

<llo_original>
// kernel: tpu_custom_call.1
$region0: #{tpu_custom_call.1}
  #allocation0 [shape = 'u32[]', space=smem, size = 0x4, offset = 0x4, fixed_abs, tag = 'smem constant byte address 0x4 - core index']
  #allocation1 [shape = 'u32[72,128]{1,0:T(1,128)}', space=vmem, size = 0x9000, scoped, tag = 'internal scratch']
  %s0 = inlined_call_operand.hbm [shape: f32[512,128], index: 0, kind: input, shape index: {}]
  %s1 = inlined_call_operand.hbm [shape: f32[128,128], index: 1, kind: input, shape index: {}]
  %s2 = inlined_call_operand.vmem [shape: f32[1,128], index: 2, kind: input, shape index: {}]
  %s3 = inlined_call_operand.hbm [shape: f32[512,128], index: 3, kind: output, shape index: {0}]
  %s4 = inlined_call_operand.hbm [shape: f32[1,2,128], index: 4, kind: output, shape index: {1}]
  %5 = xla_tuple %s3, %s4
  %s6 = sld [smem:[#allocation0]]
  $region38: #{tpu_custom_call.1} parent=0
    _
  %s8 = ssub.s32 1, %s6
  %s9 = scalar_select 0, %s8, %s6
  $region1: #{tpu_custom_call.1} parent=0
    #allocation2 [shape = 'u8[262144]{0}', space=vmem, size = 0x40000, scoped, tag = 'input window, operand 0, single buffered']
    #allocation3 [shape = 's32[1]{0}', space=sflag, size = 0x4, scoped, tag = 'scoped memory for tpu_custom_call.1']
    #allocation4 [shape = 's32[1]{0}', space=sflag, size = 0x4, scoped, tag = 'scoped memory for tpu_custom_call.1']
    #allocation5 [shape = 'u8[65536]{0}', space=vmem, size = 0x10000, scoped, tag = 'input window, operand 1, single buffered']
    #allocation6 [shape = 's32[1]{0}', space=sflag, size = 0x4, scoped, tag = 'scoped memory for tpu_custom_call.1']
    #allocation7 [shape = 'u8[262144]{0}', space=vmem, size = 0x40000, scoped, tag = 'output window, operand 0, single buffered']
    #allocation8 [shape = 'u8[1024]{0}', space=vmem, size = 0x400, scoped, tag = 'output window, operand 1, single buffered']
    #allocation9 [shape = 's32[1]{0}', space=sflag, size = 0x4, scoped, tag = 'scoped memory for tpu_custom_call.1']
    %10 = vsyncpa [#allocation3], 0
    %11 = vsyncpa [#allocation6], 0
    %12 = vsyncpa [#allocation4], 0
    %13 = vsyncpa [#allocation9], 0
    // Predicated region
    $region2: #{tpu_custom_call.1} parent=1 // pred_check
      _
    $region3: #{tpu_custom_call.1} parent=1 // pred_check_branch
      %15 = sbr.rel (0) target = $region5
    $region4: #{tpu_custom_call.1} parent=1 // pred_region
      %17 = vsyncadd [#allocation3], 0
      %s18 = sshll.u32 %s0, 4
      %s19 = int_to_ptr.hbm [resolvable:$true] %s18
      %s20 = sshll.u32 [#allocation2], 4
      %s21 = int_to_ptr.vmem [resolvable:$true] %s20
      %26 = dma.hbm_to_vmem [thread:$0]  %s19, 8192, %s21, [#allocation3], 128, 128, 8
    $region5: #{tpu_custom_call.1} parent=1 // pred_fallthru
      _
    // Predicated region
    $region6: #{tpu_custom_call.1} parent=1 // pred_check
      _
    $region7: #{tpu_custom_call.1} parent=1 // pred_check_branch
      %28 = sbr.rel (0) target = $region9
    $region8: #{tpu_custom_call.1} parent=1 // pred_region
      %30 = vsyncadd [#allocation6], 0
      %s31 = sshll.u32 %s1, 4
      %s32 = int_to_ptr.hbm [resolvable:$true] %s31
      %s33 = sshll.u32 [#allocation5], 4
      %s34 = int_to_ptr.vmem [resolvable:$true] %s33
      %39 = dma.hbm_to_vmem [thread:$0]  %s32, 2048, %s34, [#allocation6], 128, 128, 8
    $region9: #{tpu_custom_call.1} parent=1 // pred_fallthru
      _
    // Predicated region
    $region10: #{tpu_custom_call.1} parent=1 // pred_check
      _
    $region11: #{tpu_custom_call.1} parent=1 // pred_check_branch
      %41 = sbr.rel (0) target = $region13
    $region12: #{tpu_custom_call.1} parent=1 // pred_region
      _
    $region13: #{tpu_custom_call.1} parent=1 // pred_fallthru
      _
    // Predicated region
    $region14: #{tpu_custom_call.1} parent=1 // pred_check
      _
    $region15: #{tpu_custom_call.1} parent=1 // pred_check_branch
      %43 = sbr.rel (0) target = $region17
    $region16: #{tpu_custom_call.1} parent=1 // pred_region
      %45 = dma.done [#allocation3], 8192
    $region17: #{tpu_custom_call.1} parent=1 // pred_fallthru
      _
    // Predicated region
    $region18: #{tpu_custom_call.1} parent=1 // pred_check
      _
    $region19: #{tpu_custom_call.1} parent=1 // pred_check_branch
      %47 = sbr.rel (0) target = $region21
    $region20: #{tpu_custom_call.1} parent=1 // pred_region
      %49 = dma.done [#allocation6], 2048
    $region21: #{tpu_custom_call.1} parent=1 // pred_fallthru
      _
    %v50 = vld [vmem:[#allocation2] sm:$0xff]
    %v51 = vld [vmem:[#allocation2 + $0x8] sm:$0xff]
    %v52 = vld [vmem:[#allocation2 + $0x10] sm:$0xff]
    %v53 = vld [vmem:[#allocation2 + $0x18] sm:$0xff]
    %v54 = vld [vmem:[#allocation2 + $0x20] sm:$0xff]
    %v55 = vld [vmem:[#allocation2 + $0x28] sm:$0xff]
    %v56 = vld [vmem:[#allocation2 + $0x30] sm:$0xff]
    %v57 = vld [vmem:[#allocation2 + $0x38] sm:$0xff]
    %v58 = vld [vmem:[#allocation2 + $0x40] sm:$0xff]
    %v59 = vld [vmem:[#allocation2 + $0x48] sm:$0xff]
    %v60 = vld [vmem:[#allocation2 + $0x50] sm:$0xff]
    %v61 = vld [vmem:[#allocation2 + $0x58] sm:$0xff]
    %v62 = vld [vmem:[#allocation2 + $0x60] sm:$0xff]
    %v63 = vld [vmem:[#allocation2 + $0x68] sm:$0xff]
    %v64 = vld [vmem:[#allocation2 + $0x70] sm:$0xff]
    %v65 = vld [vmem:[#allocation2 + $0x78] sm:$0xff]
    %v66 = vld [vmem:[#allocation2 + $0x80] sm:$0xff]
    %v67 = vld [vmem:[#allocation2 + $0x88] sm:$0xff]
    %v68 = vld [vmem:[#allocation2 + $0x90] sm:$0xff]
    %v69 = vld [vmem:[#allocation2 + $0x98] sm:$0xff]
    %v70 = vld [vmem:[#allocation2 + $0xa0] sm:$0xff]
    %v71 = vld [vmem:[#allocation2 + $0xa8] sm:$0xff]
    %v72 = vld [vmem:[#allocation2 + $0xb0] sm:$0xff]
    %v73 = vld [vmem:[#allocation2 + $0xb8] sm:$0xff]
    %v74 = vld [vmem:[#allocation2 + $0xc0] sm:$0xff]
    %v75 = vld [vmem:[#allocation2 + $0xc8] sm:$0xff]
    %v76 = vld [vmem:[#allocation2 + $0xd0] sm:$0xff]
    %v77 = vld [vmem:[#allocation2 + $0xd8] sm:$0xff]
    %v78 = vld [vmem:[#allocation2 + $0xe0] sm:$0xff]
    %v79 = vld [vmem:[#allocation2 + $0xe8] sm:$0xff]
    %v80 = vld [vmem:[#allocation2 + $0xf0] sm:$0xff]
    %v81 = vld [vmem:[#allocation2 + $0xf8] sm:$0xff]
    %v82 = vld [vmem:[#allocation2 + $0x100] sm:$0xff]
    %v83 = vld [vmem:[#allocation2 + $0x108] sm:$0xff]
    %v84 = vld [vmem:[#allocation2 + $0x110] sm:$0xff]
    %v85 = vld [vmem:[#allocation2 + $0x118] sm:$0xff]
    %v86 = vld [vmem:[#allocation2 + $0x120] sm:$0xff]
    %v87 = vld [vmem:[#allocation2 + $0x128] sm:$0xff]
    %v88 = vld [vmem:[#allocation2 + $0x130] sm:$0xff]
    %v89 = vld [vmem:[#allocation2 + $0x138] sm:$0xff]
    %v90 = vld [vmem:[#allocation2 + $0x140] sm:$0xff]
    %v91 = vld [vmem:[#allocation2 + $0x148] sm:$0xff]
    %v92 = vld [vmem:[#allocation2 + $0x150] sm:$0xff]
    %v93 = vld [vmem:[#allocation2 + $0x158] sm:$0xff]
    %v94 = vld [vmem:[#allocation2 + $0x160] sm:$0xff]
    %v95 = vld [vmem:[#allocation2 + $0x168] sm:$0xff]
    %v96 = vld [vmem:[#allocation2 + $0x170] sm:$0xff]
    %v97 = vld [vmem:[#allocation2 + $0x178] sm:$0xff]
    %v98 = vld [vmem:[#allocation2 + $0x180] sm:$0xff]
    %v99 = vld [vmem:[#allocation2 + $0x188] sm:$0xff]
    %v100 = vld [vmem:[#allocation2 + $0x190] sm:$0xff]
    %v101 = vld [vmem:[#allocation2 + $0x198] sm:$0xff]
    %v102 = vld [vmem:[#allocation2 + $0x1a0] sm:$0xff]
    %v103 = vld [vmem:[#allocation2 + $0x1a8] sm:$0xff]
    %v104 = vld [vmem:[#allocation2 + $0x1b0] sm:$0xff]
    %v105 = vld [vmem:[#allocation2 + $0x1b8] sm:$0xff]
    %v106 = vld [vmem:[#allocation2 + $0x1c0] sm:$0xff]
    %v107 = vld [vmem:[#allocation2 + $0x1c8] sm:$0xff]
    %v108 = vld [vmem:[#allocation2 + $0x1d0] sm:$0xff]
    %v109 = vld [vmem:[#allocation2 + $0x1d8] sm:$0xff]
    %v110 = vld [vmem:[#allocation2 + $0x1e0] sm:$0xff]
    %v111 = vld [vmem:[#allocation2 + $0x1e8] sm:$0xff]
    %v112 = vld [vmem:[#allocation2 + $0x1f0] sm:$0xff]
    %v113 = vld [vmem:[#allocation2 + $0x1f8] sm:$0xff]
    %v114 = vld [vmem:[#allocation5] sm:$0xff]
    %v115 = vld [vmem:[#allocation5 + $0x8] sm:$0xff]
    %v116 = vld [vmem:[#allocation5 + $0x10] sm:$0xff]
    %v117 = vld [vmem:[#allocation5 + $0x18] sm:$0xff]
    %v118 = vld [vmem:[#allocation5 + $0x20] sm:$0xff]
    %v119 = vld [vmem:[#allocation5 + $0x28] sm:$0xff]
    %v120 = vld [vmem:[#allocation5 + $0x30] sm:$0xff]
    %v121 = vld [vmem:[#allocation5 + $0x38] sm:$0xff]
    %v122 = vld [vmem:[#allocation5 + $0x40] sm:$0xff]
    %v123 = vld [vmem:[#allocation5 + $0x48] sm:$0xff]
    %v124 = vld [vmem:[#allocation5 + $0x50] sm:$0xff]
    %v125 = vld [vmem:[#allocation5 + $0x58] sm:$0xff]
    %v126 = vld [vmem:[#allocation5 + $0x60] sm:$0xff]
    %v127 = vld [vmem:[#allocation5 + $0x68] sm:$0xff]
    %v128 = vld [vmem:[#allocation5 + $0x70] sm:$0xff]
    %v129 = vld [vmem:[#allocation5 + $0x78] sm:$0xff]
    %v130 = vld [vmem:[%s2] sm:$0x1]
    %v132 = vperm.slane %v130, 0
    %134 = vmatpush.msra.mxu0 %v129
    %135 = vmatpush.msra.mxu0 %v128
    %136 = vmatpush.msra.mxu0 %v127
    %137 = vmatpush.msra.mxu0 %v126
    %138 = vmatpush.msra.mxu0 %v125
    %139 = vmatpush.msra.mxu0 %v124
    %140 = vmatpush.msra.mxu0 %v123
    %141 = vmatpush.msra.mxu0 %v122
    %142 = vmatpush.msra.mxu0 %v121
    %143 = vmatpush.msra.mxu0 %v120
    %144 = vmatpush.msra.mxu0 %v119
    %145 = vmatpush.msra.mxu0 %v118
    %146 = vmatpush.msra.mxu0 %v117
    %147 = vmatpush.msra.mxu0 %v116
    %148 = vmatpush.msra.mxu0 %v115
    %149 = vmatpush.msra.mxu0 %v114
    %150 = vmatmul.f32.gmra.mxu0 %v50
    %v151 = vpop.f32.mrf.mxu0
    %v152 = vadd.f32 %v132, %v151
    %153 = vmatmul.f32.gmra.mxu0 %v51
    %v154 = vpop.f32.mrf.mxu0
    %v155 = vadd.f32 %v132, %v154
    %156 = vmatmul.f32.gmra.mxu0 %v52
    %v157 = vpop.f32.mrf.mxu0
    %v158 = vadd.f32 %v132, %v157
    %159 = vmatmul.f32.gmra.mxu0 %v53
    %v160 = vpop.f32.mrf.mxu0
    %v161 = vadd.f32 %v132, %v160
    %162 = vmatmul.f32.gmra.mxu0 %v54
    %v163 = vpop.f32.mrf.mxu0
    %v164 = vadd.f32 %v132, %v163
    %165 = vmatmul.f32.gmra.mxu0 %v55
    %v166 = vpop.f32.mrf.mxu0
    %v167 = vadd.f32 %v132, %v166
    %168 = vmatmul.f32.gmra.mxu0 %v56
    %v169 = vpop.f32.mrf.mxu0
    %v170 = vadd.f32 %v132, %v169
    %171 = vmatmul.f32.gmra.mxu0 %v57
    %v172 = vpop.f32.mrf.mxu0
    %v173 = vadd.f32 %v132, %v172
    %174 = vmatmul.f32.gmra.mxu0 %v58
    %v175 = vpop.f32.mrf.mxu0
    %v176 = vadd.f32 %v132, %v175
    %177 = vmatmul.f32.gmra.mxu0 %v59
    %v178 = vpop.f32.mrf.mxu0
    %v179 = vadd.f32 %v132, %v178
    %180 = vmatmul.f32.gmra.mxu0 %v60
    %v181 = vpop.f32.mrf.mxu0
    %v182 = vadd.f32 %v132, %v181
    %183 = vmatmul.f32.gmra.mxu0 %v61
    %v184 = vpop.f32.mrf.mxu0
    %v185 = vadd.f32 %v132, %v184
    %186 = vmatmul.f32.gmra.mxu0 %v62
    %v187 = vpop.f32.mrf.mxu0
    %v188 = vadd.f32 %v132, %v187
    %189 = vmatmul.f32.gmra.mxu0 %v63
    %v190 = vpop.f32.mrf.mxu0
    %v191 = vadd.f32 %v132, %v190
    %192 = vmatmul.f32.gmra.mxu0 %v64
    %v193 = vpop.f32.mrf.mxu0
    %v194 = vadd.f32 %v132, %v193
    %195 = vmatmul.f32.gmra.mxu0 %v65
    %v196 = vpop.f32.mrf.mxu0
    %v197 = vadd.f32 %v132, %v196
    %198 = vmatmul.f32.gmra.mxu0 %v66
    %v199 = vpop.f32.mrf.mxu0
    %v200 = vadd.f32 %v132, %v199
    %201 = vmatmul.f32.gmra.mxu0 %v67
    %v202 = vpop.f32.mrf.mxu0
    %v203 = vadd.f32 %v132, %v202
    %204 = vmatmul.f32.gmra.mxu0 %v68
    %v205 = vpop.f32.mrf.mxu0
    %v206 = vadd.f32 %v132, %v205
    %207 = vmatmul.f32.gmra.mxu0 %v69
    %v208 = vpop.f32.mrf.mxu0
    %v209 = vadd.f32 %v132, %v208
    %210 = vmatmul.f32.gmra.mxu0 %v70
    %v211 = vpop.f32.mrf.mxu0
    %v212 = vadd.f32 %v132, %v211
    %213 = vmatmul.f32.gmra.mxu0 %v71
    %v214 = vpop.f32.mrf.mxu0
    %v215 = vadd.f32 %v132, %v214
    %216 = vmatmul.f32.gmra.mxu0 %v72
    %v217 = vpop.f32.mrf.mxu0
    %v218 = vadd.f32 %v132, %v217
    %219 = vmatmul.f32.gmra.mxu0 %v73
    %v220 = vpop.f32.mrf.mxu0
    %v221 = vadd.f32 %v132, %v220
    %222 = vmatmul.f32.gmra.mxu0 %v74
    %v223 = vpop.f32.mrf.mxu0
    %v224 = vadd.f32 %v132, %v223
    %225 = vmatmul.f32.gmra.mxu0 %v75
    %v226 = vpop.f32.mrf.mxu0
    %v227 = vadd.f32 %v132, %v226
    %228 = vmatmul.f32.gmra.mxu0 %v76
    %v229 = vpop.f32.mrf.mxu0
    %v230 = vadd.f32 %v132, %v229
    %231 = vmatmul.f32.gmra.mxu0 %v77
    %v232 = vpop.f32.mrf.mxu0
    %v233 = vadd.f32 %v132, %v232
    %234 = vmatmul.f32.gmra.mxu0 %v78
    %v235 = vpop.f32.mrf.mxu0
    %v236 = vadd.f32 %v132, %v235
    %237 = vmatmul.f32.gmra.mxu0 %v79
    %v238 = vpop.f32.mrf.mxu0
    %v239 = vadd.f32 %v132, %v238
    %240 = vmatmul.f32.gmra.mxu0 %v80
    %v241 = vpop.f32.mrf.mxu0
    %v242 = vadd.f32 %v132, %v241
    %243 = vmatmul.f32.gmra.mxu0 %v81
    %v244 = vpop.f32.mrf.mxu0
    %v245 = vadd.f32 %v132, %v244
    %246 = vmatmul.f32.gmra.mxu0 %v82
    %v247 = vpop.f32.mrf.mxu0
    %v248 = vadd.f32 %v132, %v247
    %249 = vmatmul.f32.gmra.mxu0 %v83
    %v250 = vpop.f32.mrf.mxu0
    %v251 = vadd.f32 %v132, %v250
    %252 = vmatmul.f32.gmra.mxu0 %v84
    %v253 = vpop.f32.mrf.mxu0
    %v254 = vadd.f32 %v132, %v253
    %255 = vmatmul.f32.gmra.mxu0 %v85
    %v256 = vpop.f32.mrf.mxu0
    %v257 = vadd.f32 %v132, %v256
    %258 = vmatmul.f32.gmra.mxu0 %v86
    %v259 = vpop.f32.mrf.mxu0
    %v260 = vadd.f32 %v132, %v259
    %261 = vmatmul.f32.gmra.mxu0 %v87
    %v262 = vpop.f32.mrf.mxu0
    %v263 = vadd.f32 %v132, %v262
    %264 = vmatmul.f32.gmra.mxu0 %v88
    %v265 = vpop.f32.mrf.mxu0
    %v266 = vadd.f32 %v132, %v265
    %267 = vmatmul.f32.gmra.mxu0 %v89
    %v268 = vpop.f32.mrf.mxu0
    %v269 = vadd.f32 %v132, %v268
    %270 = vmatmul.f32.gmra.mxu0 %v90
    %v271 = vpop.f32.mrf.mxu0
    %v272 = vadd.f32 %v132, %v271
    %273 = vmatmul.f32.gmra.mxu0 %v91
    %v274 = vpop.f32.mrf.mxu0
    %v275 = vadd.f32 %v132, %v274
    %276 = vmatmul.f32.gmra.mxu0 %v92
    %v277 = vpop.f32.mrf.mxu0
    %v278 = vadd.f32 %v132, %v277
    %279 = vmatmul.f32.gmra.mxu0 %v93
    %v280 = vpop.f32.mrf.mxu0
    %v281 = vadd.f32 %v132, %v280
    %282 = vmatmul.f32.gmra.mxu0 %v94
    %v283 = vpop.f32.mrf.mxu0
    %v284 = vadd.f32 %v132, %v283
    %285 = vmatmul.f32.gmra.mxu0 %v95
    %v286 = vpop.f32.mrf.mxu0
    %v287 = vadd.f32 %v132, %v286
    %288 = vmatmul.f32.gmra.mxu0 %v96
    %v289 = vpop.f32.mrf.mxu0
    %v290 = vadd.f32 %v132, %v289
    %291 = vmatmul.f32.gmra.mxu0 %v97
    %v292 = vpop.f32.mrf.mxu0
    %v293 = vadd.f32 %v132, %v292
    %294 = vmatmul.f32.gmra.mxu0 %v98
    %v295 = vpop.f32.mrf.mxu0
    %v296 = vadd.f32 %v132, %v295
    %297 = vmatmul.f32.gmra.mxu0 %v99
    %v298 = vpop.f32.mrf.mxu0
    %v299 = vadd.f32 %v132, %v298
    %300 = vmatmul.f32.gmra.mxu0 %v100
    %v301 = vpop.f32.mrf.mxu0
    %v302 = vadd.f32 %v132, %v301
    %303 = vmatmul.f32.gmra.mxu0 %v101
    %v304 = vpop.f32.mrf.mxu0
    %v305 = vadd.f32 %v132, %v304
    %306 = vmatmul.f32.gmra.mxu0 %v102
    %v307 = vpop.f32.mrf.mxu0
    %v308 = vadd.f32 %v132, %v307
    %309 = vmatmul.f32.gmra.mxu0 %v103
    %v310 = vpop.f32.mrf.mxu0
    %v311 = vadd.f32 %v132, %v310
    %312 = vmatmul.f32.gmra.mxu0 %v104
    %v313 = vpop.f32.mrf.mxu0
    %v314 = vadd.f32 %v132, %v313
    %315 = vmatmul.f32.gmra.mxu0 %v105
    %v316 = vpop.f32.mrf.mxu0
    %v317 = vadd.f32 %v132, %v316
    %318 = vmatmul.f32.gmra.mxu0 %v106
    %v319 = vpop.f32.mrf.mxu0
    %v320 = vadd.f32 %v132, %v319
    %321 = vmatmul.f32.gmra.mxu0 %v107
    %v322 = vpop.f32.mrf.mxu0
    %v323 = vadd.f32 %v132, %v322
    %324 = vmatmul.f32.gmra.mxu0 %v108
    %v325 = vpop.f32.mrf.mxu0
    %v326 = vadd.f32 %v132, %v325
    %327 = vmatmul.f32.gmra.mxu0 %v109
    %v328 = vpop.f32.mrf.mxu0
    %v329 = vadd.f32 %v132, %v328
    %330 = vmatmul.f32.gmra.mxu0 %v110
    %v331 = vpop.f32.mrf.mxu0
    %v332 = vadd.f32 %v132, %v331
    %333 = vmatmul.f32.gmra.mxu0 %v111
    %v334 = vpop.f32.mrf.mxu0
    %v335 = vadd.f32 %v132, %v334
    %336 = vmatmul.f32.gmra.mxu0 %v112
    %v337 = vpop.f32.mrf.mxu0
    %v338 = vadd.f32 %v132, %v337
    %339 = vmatmul.f32.gmra.mxu0 %v113
    %v340 = vpop.f32.mrf.mxu0
    %v341 = vadd.f32 %v132, %v340
    %342 = vdwg.mxu0
    %343 = vst [vmem:[#allocation7] sm:$0xff] %v152
    %344 = vst [vmem:[#allocation7 + $0x8] sm:$0xff] %v155
    %345 = vst [vmem:[#allocation7 + $0x10] sm:$0xff] %v158
    %346 = vst [vmem:[#allocation7 + $0x18] sm:$0xff] %v161
    %347 = vst [vmem:[#allocation7 + $0x20] sm:$0xff] %v164
    %348 = vst [vmem:[#allocation7 + $0x28] sm:$0xff] %v167
    %349 = vst [vmem:[#allocation7 + $0x30] sm:$0xff] %v170
    %350 = vst [vmem:[#allocation7 + $0x38] sm:$0xff] %v173
    %351 = vst [vmem:[#allocation7 + $0x40] sm:$0xff] %v176
    %352 = vst [vmem:[#allocation7 + $0x48] sm:$0xff] %v179
    %353 = vst [vmem:[#allocation7 + $0x50] sm:$0xff] %v182
    %354 = vst [vmem:[#allocation7 + $0x58] sm:$0xff] %v185
    %355 = vst [vmem:[#allocation7 + $0x60] sm:$0xff] %v188
    %356 = vst [vmem:[#allocation7 + $0x68] sm:$0xff] %v191
    %357 = vst [vmem:[#allocation7 + $0x70] sm:$0xff] %v194
    %358 = vst [vmem:[#allocation7 + $0x78] sm:$0xff] %v197
    %359 = vst [vmem:[#allocation7 + $0x80] sm:$0xff] %v200
    %360 = vst [vmem:[#allocation7 + $0x88] sm:$0xff] %v203
    %361 = vst [vmem:[#allocation7 + $0x90] sm:$0xff] %v206
    %362 = vst [vmem:[#allocation7 + $0x98] sm:$0xff] %v209
    %363 = vst [vmem:[#allocation7 + $0xa0] sm:$0xff] %v212
    %364 = vst [vmem:[#allocation7 + $0xa8] sm:$0xff] %v215
    %365 = vst [vmem:[#allocation7 + $0xb0] sm:$0xff] %v218
    %366 = vst [vmem:[#allocation7 + $0xb8] sm:$0xff] %v221
    %367 = vst [vmem:[#allocation7 + $0xc0] sm:$0xff] %v224
    %368 = vst [vmem:[#allocation7 + $0xc8] sm:$0xff] %v227
    %369 = vst [vmem:[#allocation7 + $0xd0] sm:$0xff] %v230
    %370 = vst [vmem:[#allocation7 + $0xd8] sm:$0xff] %v233
    %371 = vst [vmem:[#allocation7 + $0xe0] sm:$0xff] %v236
    %372 = vst [vmem:[#allocation7 + $0xe8] sm:$0xff] %v239
    %373 = vst [vmem:[#allocation7 + $0xf0] sm:$0xff] %v242
    %374 = vst [vmem:[#allocation7 + $0xf8] sm:$0xff] %v245
    %375 = vst [vmem:[#allocation7 + $0x100] sm:$0xff] %v248
    %376 = vst [vmem:[#allocation7 + $0x108] sm:$0xff] %v251
    %377 = vst [vmem:[#allocation7 + $0x110] sm:$0xff] %v254
    %378 = vst [vmem:[#allocation7 + $0x118] sm:$0xff] %v257
    %379 = vst [vmem:[#allocation7 + $0x120] sm:$0xff] %v260
    %380 = vst [vmem:[#allocation7 + $0x128] sm:$0xff] %v263
    %381 = vst [vmem:[#allocation7 + $0x130] sm:$0xff] %v266
    %382 = vst [vmem:[#allocation7 + $0x138] sm:$0xff] %v269
    %383 = vst [vmem:[#allocation7 + $0x140] sm:$0xff] %v272
    %384 = vst [vmem:[#allocation7 + $0x148] sm:$0xff] %v275
    %385 = vst [vmem:[#allocation7 + $0x150] sm:$0xff] %v278
    %386 = vst [vmem:[#allocation7 + $0x158] sm:$0xff] %v281
    %387 = vst [vmem:[#allocation7 + $0x160] sm:$0xff] %v284
    %388 = vst [vmem:[#allocation7 + $0x168] sm:$0xff] %v287
    %389 = vst [vmem:[#allocation7 + $0x170] sm:$0xff] %v290
    %390 = vst [vmem:[#allocation7 + $0x178] sm:$0xff] %v293
    %391 = vst [vmem:[#allocation7 + $0x180] sm:$0xff] %v296
    %392 = vst [vmem:[#allocation7 + $0x188] sm:$0xff] %v299
    %393 = vst [vmem:[#allocation7 + $0x190] sm:$0xff] %v302
    %394 = vst [vmem:[#allocation7 + $0x198] sm:$0xff] %v305
    %395 = vst [vmem:[#allocation7 + $0x1a0] sm:$0xff] %v308
    %396 = vst [vmem:[#allocation7 + $0x1a8] sm:$0xff] %v311
    %397 = vst [vmem:[#allocation7 + $0x1b0] sm:$0xff] %v314
    %398 = vst [vmem:[#allocation7 + $0x1b8] sm:$0xff] %v317
    %399 = vst [vmem:[#allocation7 + $0x1c0] sm:$0xff] %v320
    %400 = vst [vmem:[#allocation7 + $0x1c8] sm:$0xff] %v323
    %401 = vst [vmem:[#allocation7 + $0x1d0] sm:$0xff] %v326
    %402 = vst [vmem:[#allocation7 + $0x1d8] sm:$0xff] %v329
    %403 = vst [vmem:[#allocation7 + $0x1e0] sm:$0xff] %v332
    %404 = vst [vmem:[#allocation7 + $0x1e8] sm:$0xff] %v335
    %405 = vst [vmem:[#allocation7 + $0x1f0] sm:$0xff] %v338
    %406 = vst [vmem:[#allocation7 + $0x1f8] sm:$0xff] %v341
    %v407 = vadd.f32 %v152, %v155
    %v408 = vadd.f32 %v407, %v158
    %v409 = vadd.f32 %v408, %v161
    %v410 = vadd.f32 %v409, %v164
    %v411 = vadd.f32 %v410, %v167
    %v412 = vadd.f32 %v411, %v170
    %v413 = vadd.f32 %v412, %v173
    %v414 = vadd.f32 %v413, %v176
    %v415 = vadd.f32 %v414, %v179
    %v416 = vadd.f32 %v415, %v182
    %v417 = vadd.f32 %v416, %v185
    %v418 = vadd.f32 %v417, %v188
    %v419 = vadd.f32 %v418, %v191
    %v420 = vadd.f32 %v419, %v194
    %v421 = vadd.f32 %v420, %v197
    %v422 = vadd.f32 %v421, %v200
    %v423 = vadd.f32 %v422, %v203
    %v424 = vadd.f32 %v423, %v206
    %v425 = vadd.f32 %v424, %v209
    %v426 = vadd.f32 %v425, %v212
    %v427 = vadd.f32 %v426, %v215
    %v428 = vadd.f32 %v427, %v218
    %v429 = vadd.f32 %v428, %v221
    %v430 = vadd.f32 %v429, %v224
    %v431 = vadd.f32 %v430, %v227
    %v432 = vadd.f32 %v431, %v230
    %v433 = vadd.f32 %v432, %v233
    %v434 = vadd.f32 %v433, %v236
    %v435 = vadd.f32 %v434, %v239
    %v436 = vadd.f32 %v435, %v242
    %v437 = vadd.f32 %v436, %v245
    %v438 = vadd.f32 %v437, %v248
    %v439 = vadd.f32 %v438, %v251
    %v440 = vadd.f32 %v439, %v254
    %v441 = vadd.f32 %v440, %v257
    %v442 = vadd.f32 %v441, %v260
    %v443 = vadd.f32 %v442, %v263
    %v444 = vadd.f32 %v443, %v266
    %v445 = vadd.f32 %v444, %v269
    %v446 = vadd.f32 %v445, %v272
    %v447 = vadd.f32 %v446, %v275
    %v448 = vadd.f32 %v447, %v278
    %v449 = vadd.f32 %v448, %v281
    %v450 = vadd.f32 %v449, %v284
    %v451 = vadd.f32 %v450, %v287
    %v452 = vadd.f32 %v451, %v290
    %v453 = vadd.f32 %v452, %v293
    %v454 = vadd.f32 %v453, %v296
    %v455 = vadd.f32 %v454, %v299
    %v456 = vadd.f32 %v455, %v302
    %v457 = vadd.f32 %v456, %v305
    %v458 = vadd.f32 %v457, %v308
    %v459 = vadd.f32 %v458, %v311
    %v460 = vadd.f32 %v459, %v314
    %v461 = vadd.f32 %v460, %v317
    %v462 = vadd.f32 %v461, %v320
    %v463 = vadd.f32 %v462, %v323
    %v464 = vadd.f32 %v463, %v326
    %v465 = vadd.f32 %v464, %v329
    %v466 = vadd.f32 %v465, %v332
    %v467 = vadd.f32 %v466, %v335
    %v468 = vadd.f32 %v467, %v338
    %v469 = vadd.f32 %v468, %v341
    %v470 = vrot.slane %v469, 4
    %v471 = vadd.f32 %v469, %v470
    %v472 = vrot.slane %v471, 2
    %v473 = vadd.f32 %v471, %v472
    %v474 = vrot.slane %v473, 1
    %v475 = vadd.f32 %v473, %v474
    %v476 = vmul.f32 %v152, %v152
    %v477 = vmul.f32 %v155, %v155
    %v478 = vmul.f32 %v158, %v158
    %v479 = vmul.f32 %v161, %v161
    %v480 = vmul.f32 %v164, %v164
    %v481 = vmul.f32 %v167, %v167
    %v482 = vmul.f32 %v170, %v170
    %v483 = vmul.f32 %v173, %v173
    %v484 = vmul.f32 %v176, %v176
    %v485 = vmul.f32 %v179, %v179
    %v486 = vmul.f32 %v182, %v182
    %v487 = vmul.f32 %v185, %v185
    %v488 = vmul.f32 %v188, %v188
    %v489 = vmul.f32 %v191, %v191
    %v490 = vmul.f32 %v194, %v194
    %v491 = vmul.f32 %v197, %v197
    %v492 = vmul.f32 %v200, %v200
    %v493 = vmul.f32 %v203, %v203
    %v494 = vmul.f32 %v206, %v206
    %v495 = vmul.f32 %v209, %v209
    %v496 = vmul.f32 %v212, %v212
    %v497 = vmul.f32 %v215, %v215
    %v498 = vmul.f32 %v218, %v218
    %v499 = vmul.f32 %v221, %v221
    %v500 = vmul.f32 %v224, %v224
    %v501 = vmul.f32 %v227, %v227
    %v502 = vmul.f32 %v230, %v230
    %v503 = vmul.f32 %v233, %v233
    %v504 = vmul.f32 %v236, %v236
    %v505 = vmul.f32 %v239, %v239
    %v506 = vmul.f32 %v242, %v242
    %v507 = vmul.f32 %v245, %v245
    %v508 = vmul.f32 %v248, %v248
    %v509 = vmul.f32 %v251, %v251
    %v510 = vmul.f32 %v254, %v254
    %v511 = vmul.f32 %v257, %v257
    %v512 = vmul.f32 %v260, %v260
    %v513 = vmul.f32 %v263, %v263
    %v514 = vmul.f32 %v266, %v266
    %v515 = vmul.f32 %v269, %v269
    %v516 = vmul.f32 %v272, %v272
    %v517 = vmul.f32 %v275, %v275
    %v518 = vmul.f32 %v278, %v278
    %v519 = vmul.f32 %v281, %v281
    %v520 = vmul.f32 %v284, %v284
    %v521 = vmul.f32 %v287, %v287
    %v522 = vmul.f32 %v290, %v290
    %v523 = vmul.f32 %v293, %v293
    %v524 = vmul.f32 %v296, %v296
    %v525 = vmul.f32 %v299, %v299
    %v526 = vmul.f32 %v302, %v302
    %v527 = vmul.f32 %v305, %v305
    %v528 = vmul.f32 %v308, %v308
    %v529 = vmul.f32 %v311, %v311
    %v530 = vmul.f32 %v314, %v314
    %v531 = vmul.f32 %v317, %v317
    %v532 = vmul.f32 %v320, %v320
    %v533 = vmul.f32 %v323, %v323
    %v534 = vmul.f32 %v326, %v326
    %v535 = vmul.f32 %v329, %v329
    %v536 = vmul.f32 %v332, %v332
    %v537 = vmul.f32 %v335, %v335
    %v538 = vmul.f32 %v338, %v338
    %v539 = vmul.f32 %v341, %v341
    %v540 = vadd.f32 %v476, %v477
    %v541 = vadd.f32 %v540, %v478
    %v542 = vadd.f32 %v541, %v479
    %v543 = vadd.f32 %v542, %v480
    %v544 = vadd.f32 %v543, %v481
    %v545 = vadd.f32 %v544, %v482
    %v546 = vadd.f32 %v545, %v483
    %v547 = vadd.f32 %v546, %v484
    %v548 = vadd.f32 %v547, %v485
    %v549 = vadd.f32 %v548, %v486
    %v550 = vadd.f32 %v549, %v487
    %v551 = vadd.f32 %v550, %v488
    %v552 = vadd.f32 %v551, %v489
    %v553 = vadd.f32 %v552, %v490
    %v554 = vadd.f32 %v553, %v491
    %v555 = vadd.f32 %v554, %v492
    %v556 = vadd.f32 %v555, %v493
    %v557 = vadd.f32 %v556, %v494
    %v558 = vadd.f32 %v557, %v495
    %v559 = vadd.f32 %v558, %v496
    %v560 = vadd.f32 %v559, %v497
    %v561 = vadd.f32 %v560, %v498
    %v562 = vadd.f32 %v561, %v499
    %v563 = vadd.f32 %v562, %v500
    %v564 = vadd.f32 %v563, %v501
    %v565 = vadd.f32 %v564, %v502
    %v566 = vadd.f32 %v565, %v503
    %v567 = vadd.f32 %v566, %v504
    %v568 = vadd.f32 %v567, %v505
    %v569 = vadd.f32 %v568, %v506
    %v570 = vadd.f32 %v569, %v507
    %v571 = vadd.f32 %v570, %v508
    %v572 = vadd.f32 %v571, %v509
    %v573 = vadd.f32 %v572, %v510
    %v574 = vadd.f32 %v573, %v511
    %v575 = vadd.f32 %v574, %v512
    %v576 = vadd.f32 %v575, %v513
    %v577 = vadd.f32 %v576, %v514
    %v578 = vadd.f32 %v577, %v515
    %v579 = vadd.f32 %v578, %v516
    %v580 = vadd.f32 %v579, %v517
    %v581 = vadd.f32 %v580, %v518
    %v582 = vadd.f32 %v581, %v519
    %v583 = vadd.f32 %v582, %v520
    %v584 = vadd.f32 %v583, %v521
    %v585 = vadd.f32 %v584, %v522
    %v586 = vadd.f32 %v585, %v523
    %v587 = vadd.f32 %v586, %v524
    %v588 = vadd.f32 %v587, %v525
    %v589 = vadd.f32 %v588, %v526
    %v590 = vadd.f32 %v589, %v527
    %v591 = vadd.f32 %v590, %v528
    %v592 = vadd.f32 %v591, %v529
    %v593 = vadd.f32 %v592, %v530
    %v594 = vadd.f32 %v593, %v531
    %v595 = vadd.f32 %v594, %v532
    %v596 = vadd.f32 %v595, %v533
    %v597 = vadd.f32 %v596, %v534
    %v598 = vadd.f32 %v597, %v535
    %v599 = vadd.f32 %v598, %v536
    %v600 = vadd.f32 %v599, %v537
    %v601 = vadd.f32 %v600, %v538
    %v602 = vadd.f32 %v601, %v539
    %v603 = vrot.slane %v602, 4
    %v604 = vadd.f32 %v602, %v603
    %v605 = vrot.slane %v604, 2
    %v606 = vadd.f32 %v604, %v605
    %v607 = vrot.slane %v606, 1
    %v608 = vadd.f32 %v606, %v607
    %vm609 = vcmask 1040384
    %v610 = vsel %vm609, %v475, %v608
    %611 = vst [vmem:[#allocation8] sm:$0x3] %v610
    // Predicated region
    $region22: #{tpu_custom_call.1} parent=1 // pred_check
      _
    $region23: #{tpu_custom_call.1} parent=1 // pred_check_branch
      %613 = sbr.rel (0) target = $region25
    $region24: #{tpu_custom_call.1} parent=1 // pred_region
      %615 = vsyncadd [#allocation4], 0
      %s616 = sshll.u32 [#allocation7], 4
      %s617 = int_to_ptr.vmem [resolvable:$true] %s616
      %s618 = sshll.u32 %s3, 4
      %s619 = int_to_ptr.hbm [resolvable:$true] %s618
      %624 = dma.vmem_to_hbm [thread:$0]  %s617, 8192, %s619, [#allocation4], 128, 128, 8
    $region25: #{tpu_custom_call.1} parent=1 // pred_fallthru
      _
    // Predicated region
    $region26: #{tpu_custom_call.1} parent=1 // pred_check
      _
    $region27: #{tpu_custom_call.1} parent=1 // pred_check_branch
      %626 = sbr.rel (0) target = $region29
    $region28: #{tpu_custom_call.1} parent=1 // pred_region
      %628 = vsyncadd [#allocation9], 0
      %s630 = sshll.u32 [#allocation8], 4
      %s631 = int_to_ptr.vmem [resolvable:$true] %s630
      %s632 = sshll.u32 %s4, 4
      %s633 = int_to_ptr.hbm [resolvable:$true] %s632
      %635 = dma.vmem_to_hbm [thread:$0]  %s631, 32, %s633, [#allocation9]
    $region29: #{tpu_custom_call.1} parent=1 // pred_fallthru
      _
    // Predicated region
    $region30: #{tpu_custom_call.1} parent=1 // pred_check
      _
    $region31: #{tpu_custom_call.1} parent=1 // pred_check_branch
      %637 = sbr.rel (0) target = $region33
    $region32: #{tpu_custom_call.1} parent=1 // pred_region
      %639 = dma.done [#allocation4], 8192
    $region33: #{tpu_custom_call.1} parent=1 // pred_fallthru
      _
    // Predicated region
    $region34: #{tpu_custom_call.1} parent=1 // pred_check
      _
    $region35: #{tpu_custom_call.1} parent=1 // pred_check_branch
      %641 = sbr.rel (0) target = $region37
    $region36: #{tpu_custom_call.1} parent=1 // pred_region
      %643 = dma.done [#allocation9], 32
    $region37: #{tpu_custom_call.1} parent=1 // pred_fallthru
      _
    %644 = vsyncpa [#allocation3], 1
    %645 = vsyncpa [#allocation6], 1
    %646 = vsyncpa [#allocation4], 1
    %647 = vsyncpa [#allocation9], 1

</llo_original>
